<compile_context>
chip_gen: v6e
topology: v6e:2x2x1
jax: 0.10.0
libtpu: 0.0.40
codegen_flags: <defaults>
</compile_context>

<pallas_src>
import functools

import jax
import jax.numpy as jnp
from jax.experimental import pallas as pl
from jax.experimental.pallas import tpu as pltpu


# --------------------------------------------------------------------------- #
# Kernel
# --------------------------------------------------------------------------- #
def _lm_head_kernel(w_ref, xt_ref, o_ref):
    """One (vocab, row) tile:  out[tv, tm] = W[tv, H] @ xT[H, tm]  (f32 acc)."""
    acc = jax.lax.dot_general(
        w_ref[...],                    # [tv, H]  native nn.Linear layout
        xt_ref[...],                   # [H, tm]  transposed activations
        dimension_numbers=(((1,), (0,)), ((), ())),   # plain matmul, no trans
        preferred_element_type=jnp.float32,
    )
    o_ref[...] = acc.astype(o_ref.dtype)


# --------------------------------------------------------------------------- #
# Helpers
# --------------------------------------------------------------------------- #
def _round_up(x, m):
    return ((x + m - 1) // m) * m


def _vmem_capacity_bytes():
    """Physical VMEM per TensorCore; conservative 64 MiB fallback."""
    try:
        info = pltpu.get_tpu_info()
        for attr in ("vmem_capacity_bytes", "vmem_bytes", "vmem_capacity"):
            if hasattr(info, attr):
                return int(getattr(info, attr))
    except Exception:
        pass
    return 64 << 20


def _num_tensorcores_per_chip():
    """2 on dual-TC generations (v4 / v5p / v7x), else 1."""
    try:
        kind = jax.devices()[0].device_kind.lower()
        if any(tag in kind for tag in ("v7", "v4", "v5p")):
            return 2
    except Exception:
        pass
    return 1


# --------------------------------------------------------------------------- #
# Wrapper around pallas_call
# --------------------------------------------------------------------------- #
def _lm_head_matmul(x2d, weight):
    """x2d: [M, H], weight: [V, H] (nn.Linear layout) -> [M, V] = x2d @ W.T."""
    M, H = x2d.shape
    V, Hw = weight.shape
    assert Hw == H, (Hw, H)
    out_dt = x2d.dtype

    # Match operand dtypes for the MXU by casting the (tiny) activations; the
    # weight is streamed untouched in whatever dtype the caller stores it.
    # TODO(synk): callers that can tolerate it should store the LM-head weight
    # in bf16 (v5e/v6e also int8, v7x fp8) -- this kernel is purely bound by
    # weight HBM bytes, so that is a direct 2-4x wall-clock win.
    if x2d.dtype != weight.dtype:
        x2d = x2d.astype(weight.dtype)

    x_item = jnp.dtype(x2d.dtype).itemsize
    w_item = jnp.dtype(weight.dtype).itemsize
    o_item = jnp.dtype(out_dt).itemsize

    # ---- row (M) tiling: pad to the packing multiple, tile at <= 256 --------
    m_mult = max(8, 32 // x_item)                 # 8 f32 / 16 bf16 / 32 int8
    Mp = _round_up(max(M, 1), m_mult)
    x_p = jnp.pad(x2d, ((0, Mp - M), (0, 0))) if Mp != M else x2d
    xt = x_p.T                                    # [H, Mp], tiny transpose
    tm = Mp if Mp <= 256 else 256

    # ---- vocab (V) tiling: chip-aware, weight never padded -------------------
    vmem_cap = _vmem_capacity_bytes()
    n_cores = _num_tensorcores_per_chip()
    limit_cap = vmem_cap - (12 << 20)             # headroom for compiler scratch
    w_tile_cap = (24 << 20) if vmem_cap > (96 << 20) else (14 << 20)

    x_buf = H * tm * x_item                       # activation buffer (per copy)
    row_bytes = H * w_item + tm * o_item          # per vocab row, per buffer
    avail = limit_cap - 2 * x_buf - (4 << 20)
    tv_fit = max(avail, 0) // (2 * row_bytes)
    tv_cap = w_tile_cap // (H * w_item)
    tv = max(128, (min(tv_fit, tv_cap) // 128) * 128)

    if tv >= V:
        tv, n_v = V, 1                            # single full-extent block
    else:
        n_v = pl.cdiv(V, tv)
    if n_cores > 1 and V > 128 * n_cores and n_v % n_cores != 0:
        # Even split across TensorCores (megacore): avoids an idle-TC tail.
        n_v = _round_up(n_v, n_cores)
        tv = _round_up(pl.cdiv(V, n_v), 128)
        n_v = pl.cdiv(V, tv)

    n_m = pl.cdiv(Mp, tm)
    grid = (n_m, n_v)

    vmem_bytes = (2 * tv * H * w_item             # weight (double-buffered)
                  + 2 * x_buf                     # activations
                  + 2 * tv * tm * o_item          # output tiles
                  + (4 << 20))                    # margin
    vmem_limit = int(min(max(vmem_bytes, 32 << 20), limit_cap))

    out_t = pl.pallas_call(
        _lm_head_kernel,
        out_shape=jax.ShapeDtypeStruct((V, Mp), out_dt),
        grid_spec=pltpu.PrefetchScalarGridSpec(
            num_scalar_prefetch=0,
            grid=grid,
            in_specs=[
                pl.BlockSpec((tv, H), lambda i, j: (j, 0)),   # weight, streamed
                pl.BlockSpec((H, tm), lambda i, j: (0, i)),   # xT, resident per row-block
            ],
            out_specs=pl.BlockSpec((tv, tm), lambda i, j: (j, i)),
        ),
        compiler_params=pltpu.CompilerParams(
            dimension_semantics=("parallel", "parallel"),
            vmem_limit_bytes=vmem_limit,
        ),
    )(weight, xt)

    return out_t[:, :M].T                         # [M, V]


# --------------------------------------------------------------------------- #
# Module forward
# --------------------------------------------------------------------------- #
@functools.partial(jax.jit, static_argnames=("acc_test",))
def ipex_lm_head_forward(x, weight, bias=None, *, acc_test=False):
    """JAX equivalent of IPEXLmHeadLinearAllreduceWithPadding.forward
    (single-device path; distributed all-reduce branch not taken)."""
    n_dim = weight.shape[0]

    # --- glue (matches the PyTorch reshapes / slicing) ---
    if x.ndim > 3:
        x = x.reshape(-1, x.shape[-2], x.shape[-1])
    if not acc_test:
        x = x[:, -1:, :]                          # last token only, [B, 1, H]

    B, S, H = x.shape
    x2d = x.reshape(B * S, H)

    out2d = _lm_head_matmul(x2d, weight)          # [B*S, V]  (Pallas kernel)
    if bias is not None:
        out2d = out2d + bias.astype(out2d.dtype)  # bias in wrapper (fuses in XLA)

    out = out2d.reshape(B, S, n_dim)
    return out[:, :, :n_dim]                      # no-op slice, kept for fidelity
    # TODO(synk): distributed path (hidden-dim sharding + dist.all_reduce over
    # mp_group) is a multi-chip collective; not emulated on a single device.


# --------------------------------------------------------------------------- #
# Self-test
# --------------------------------------------------------------------------- #
if __name__ == "__main__":
    key = jax.random.PRNGKey(0)
    k_x, k_w, k_b = jax.random.split(key, 3)

    B, S, H = 2, 8, 256      # batch, seq, hidden
    V = 512                  # (padded) vocab size == n_dim == weight.shape[0]

    x = jax.random.normal(k_x, (B, S, H), dtype=jnp.float32)
    weight = jax.random.normal(k_w, (V, H), dtype=jnp.float32) * 0.02
    bias = jax.random.normal(k_b, (V,), dtype=jnp.float32) * 0.01

    out = ipex_lm_head_forward(x, weight, bias, acc_test=False)
    out = jax.block_until_ready(out)

    # reference: last-token linear
    ref = x[:, -1:, :] @ weight.T + bias
    assert out.shape == (B, 1, V), out.shape
    assert jnp.allclose(out, ref, atol=1e-4, rtol=1e-4), float(
        jnp.max(jnp.abs(out - ref)))

    print("KERNEL_OK")
</pallas_src>

<mosaic_0001>
module attributes {stable_mosaic.version = 11 : i64} {
  func.func @_lm_head_kernel(%arg0: i32, %arg1: i32, %arg2: memref<512x256xf32, #tpu.memory_space<vmem>>, %arg3: memref<256x8xf32, #tpu.memory_space<vmem>>, %arg4: memref<512x8xf32, #tpu.memory_space<vmem>>) attributes {dimension_semantics = [#tpu.dimension_semantics<parallel>, #tpu.dimension_semantics<parallel>], iteration_bounds = array<i64: 1, 1>, scalar_prefetch = 0 : i64, scratch_operands = 0 : i64, tpu.core_type = #tpu.core_type<tc>, window_params = [{transform_indices = @transform_0, window_bounds = array<i64: 512, 256>}, {transform_indices = @transform_1, window_bounds = array<i64: 256, 8>}, {transform_indices = @transform_2, window_bounds = array<i64: 512, 8>}]} {
    %c0 = arith.constant 0 : index
    %c0_0 = arith.constant 0 : index
    %0 = vector.load %arg2[%c0, %c0_0] : memref<512x256xf32, #tpu.memory_space<vmem>>, vector<512x256xf32>
    %c0_1 = arith.constant 0 : index
    %c0_2 = arith.constant 0 : index
    %1 = vector.load %arg3[%c0_1, %c0_2] : memref<256x8xf32, #tpu.memory_space<vmem>>, vector<256x8xf32>
    %cst = arith.constant dense<0.000000e+00> : vector<512x8xf32>
    %2 = tpu.matmul %0, %1, %cst {dimension_numbers = #tpu.dot_dimension_numbers<[1], [0], [0], [1], [0, 0, 1, 1], [], []>} : vector<512x256xf32>, vector<256x8xf32>, vector<512x8xf32> -> vector<512x8xf32>
    %c0_3 = arith.constant 0 : index
    %c0_4 = arith.constant 0 : index
    %3 = vector.load %arg4[%c0_3, %c0_4] : memref<512x8xf32, #tpu.memory_space<vmem>>, vector<512x8xf32>
    tpu.vector_store %arg4[%c0_3, %c0_4], %2 {strides = array<i32>} : memref<512x8xf32, #tpu.memory_space<vmem>>, vector<512x8xf32>,
    return
  }
  func.func @transform_0(%arg0: i32, %arg1: i32) -> (i32, i32) {
    %c0_i32 = arith.constant 0 : i32
    %c0_i32_0 = arith.constant 0 : i32
    return %arg1, %c0_i32 : i32, i32
  }
  func.func @transform_1(%arg0: i32, %arg1: i32) -> (i32, i32) {
    %c0_i32 = arith.constant 0 : i32
    %c0_i32_0 = arith.constant 0 : i32
    return %c0_i32, %arg0 : i32, i32
  }
  func.func @transform_2(%arg0: i32, %arg1: i32) -> (i32, i32) {
    %c0_i32 = arith.constant 0 : i32
    return %arg1, %arg0 : i32, i32
  }
}

</mosaic_0001>

<llo_original>
// kernel: ipex_lm_head_forward.1
$region0: #{ipex_lm_head_forward.1}
  #allocation0 [shape = 'u32[]', space=smem, size = 0x4, offset = 0x4, fixed_abs, tag = 'smem constant byte address 0x4 - core index']
  #allocation1 [shape = 'u32[144,128]{1,0:T(1,128)}', space=vmem, size = 0x12000, scoped, tag = 'internal scratch']
  %s0 = inlined_call_operand.hbm [shape: f32[512,256], index: 0, kind: input, shape index: {}]
  %s1 = inlined_call_operand.vmem [shape: f32[256,8], index: 1, kind: input, shape index: {}]
  %s2 = inlined_call_operand.vmem [shape: f32[512,8], index: 2, kind: output, shape index: {}]
  %s3 = sld [smem:[#allocation0]]
  $region22: #{ipex_lm_head_forward.1} parent=0
    _
  %s5 = ssub.s32 1, %s3
  %s6 = scalar_select 0, %s5, %s3
  $region1: #{ipex_lm_head_forward.1} parent=0
    #allocation2 [shape = 'u8[524288]{0}', space=vmem, size = 0x80000, scoped, tag = 'input window, operand 0, single buffered']
    #allocation3 [shape = 's32[1]{0}', space=sflag, size = 0x4, scoped, tag = 'scoped memory for ipex_lm_head_forward.1']
    %7 = vsyncpa [#allocation3], 0
    // Predicated region
    $region2: #{ipex_lm_head_forward.1} parent=1 // pred_check
      _
    $region3: #{ipex_lm_head_forward.1} parent=1 // pred_check_branch
      %9 = sbr.rel (0) target = $region5
    $region4: #{ipex_lm_head_forward.1} parent=1 // pred_region
      %s11 = ssub.s32 16384, 16384
      %12 = vsyncadd [#allocation3], %s11
      %s13 = sshll.u32 [#allocation2], 4
      %s14 = int_to_ptr.vmem [resolvable:$true] %s13
      %19 = dma.hbm_to_vmem [thread:$0]  %s0, 16384, %s14, [#allocation3], 256, 256, 16
    $region5: #{ipex_lm_head_forward.1} parent=1 // pred_fallthru
      _
    // Predicated region
    $region6: #{ipex_lm_head_forward.1} parent=1 // pred_check
      _
    $region7: #{ipex_lm_head_forward.1} parent=1 // pred_check_branch
      %21 = sbr.rel (0) target = $region9
    $region8: #{ipex_lm_head_forward.1} parent=1 // pred_region
      _
    $region9: #{ipex_lm_head_forward.1} parent=1 // pred_fallthru
      _
    // Predicated region
    $region10: #{ipex_lm_head_forward.1} parent=1 // pred_check
      _
    $region11: #{ipex_lm_head_forward.1} parent=1 // pred_check_branch
      %23 = sbr.rel (0) target = $region13
    $region12: #{ipex_lm_head_forward.1} parent=1 // pred_region
      %24 = dma.done [#allocation3], 16384
    $region13: #{ipex_lm_head_forward.1} parent=1 // pred_fallthru
      _
    %v25 = vld [vmem:[#allocation2] sm:$0xff]
    %v26 = vld [vmem:[#allocation2 + $0x8] sm:$0xff]
    %v27 = vld [vmem:[#allocation2 + $0x10] sm:$0xff]
    %v28 = vld [vmem:[#allocation2 + $0x18] sm:$0xff]
    %v29 = vld [vmem:[#allocation2 + $0x20] sm:$0xff]
    %v30 = vld [vmem:[#allocation2 + $0x28] sm:$0xff]
    %v31 = vld [vmem:[#allocation2 + $0x30] sm:$0xff]
    %v32 = vld [vmem:[#allocation2 + $0x38] sm:$0xff]
    %v33 = vld [vmem:[#allocation2 + $0x40] sm:$0xff]
    %v34 = vld [vmem:[#allocation2 + $0x48] sm:$0xff]
    %v35 = vld [vmem:[#allocation2 + $0x50] sm:$0xff]
    %v36 = vld [vmem:[#allocation2 + $0x58] sm:$0xff]
    %v37 = vld [vmem:[#allocation2 + $0x60] sm:$0xff]
    %v38 = vld [vmem:[#allocation2 + $0x68] sm:$0xff]
    %v39 = vld [vmem:[#allocation2 + $0x70] sm:$0xff]
    %v40 = vld [vmem:[#allocation2 + $0x78] sm:$0xff]
    %v41 = vld [vmem:[#allocation2 + $0x80] sm:$0xff]
    %v42 = vld [vmem:[#allocation2 + $0x88] sm:$0xff]
    %v43 = vld [vmem:[#allocation2 + $0x90] sm:$0xff]
    %v44 = vld [vmem:[#allocation2 + $0x98] sm:$0xff]
    %v45 = vld [vmem:[#allocation2 + $0xa0] sm:$0xff]
    %v46 = vld [vmem:[#allocation2 + $0xa8] sm:$0xff]
    %v47 = vld [vmem:[#allocation2 + $0xb0] sm:$0xff]
    %v48 = vld [vmem:[#allocation2 + $0xb8] sm:$0xff]
    %v49 = vld [vmem:[#allocation2 + $0xc0] sm:$0xff]
    %v50 = vld [vmem:[#allocation2 + $0xc8] sm:$0xff]
    %v51 = vld [vmem:[#allocation2 + $0xd0] sm:$0xff]
    %v52 = vld [vmem:[#allocation2 + $0xd8] sm:$0xff]
    %v53 = vld [vmem:[#allocation2 + $0xe0] sm:$0xff]
    %v54 = vld [vmem:[#allocation2 + $0xe8] sm:$0xff]
    %v55 = vld [vmem:[#allocation2 + $0xf0] sm:$0xff]
    %v56 = vld [vmem:[#allocation2 + $0xf8] sm:$0xff]
    %v57 = vld [vmem:[#allocation2 + $0x100] sm:$0xff]
    %v58 = vld [vmem:[#allocation2 + $0x108] sm:$0xff]
    %v59 = vld [vmem:[#allocation2 + $0x110] sm:$0xff]
    %v60 = vld [vmem:[#allocation2 + $0x118] sm:$0xff]
    %v61 = vld [vmem:[#allocation2 + $0x120] sm:$0xff]
    %v62 = vld [vmem:[#allocation2 + $0x128] sm:$0xff]
    %v63 = vld [vmem:[#allocation2 + $0x130] sm:$0xff]
    %v64 = vld [vmem:[#allocation2 + $0x138] sm:$0xff]
    %v65 = vld [vmem:[#allocation2 + $0x140] sm:$0xff]
    %v66 = vld [vmem:[#allocation2 + $0x148] sm:$0xff]
    %v67 = vld [vmem:[#allocation2 + $0x150] sm:$0xff]
    %v68 = vld [vmem:[#allocation2 + $0x158] sm:$0xff]
    %v69 = vld [vmem:[#allocation2 + $0x160] sm:$0xff]
    %v70 = vld [vmem:[#allocation2 + $0x168] sm:$0xff]
    %v71 = vld [vmem:[#allocation2 + $0x170] sm:$0xff]
    %v72 = vld [vmem:[#allocation2 + $0x178] sm:$0xff]
    %v73 = vld [vmem:[#allocation2 + $0x180] sm:$0xff]
    %v74 = vld [vmem:[#allocation2 + $0x188] sm:$0xff]
    %v75 = vld [vmem:[#allocation2 + $0x190] sm:$0xff]
    %v76 = vld [vmem:[#allocation2 + $0x198] sm:$0xff]
    %v77 = vld [vmem:[#allocation2 + $0x1a0] sm:$0xff]
    %v78 = vld [vmem:[#allocation2 + $0x1a8] sm:$0xff]
    %v79 = vld [vmem:[#allocation2 + $0x1b0] sm:$0xff]
    %v80 = vld [vmem:[#allocation2 + $0x1b8] sm:$0xff]
    %v81 = vld [vmem:[#allocation2 + $0x1c0] sm:$0xff]
    %v82 = vld [vmem:[#allocation2 + $0x1c8] sm:$0xff]
    %v83 = vld [vmem:[#allocation2 + $0x1d0] sm:$0xff]
    %v84 = vld [vmem:[#allocation2 + $0x1d8] sm:$0xff]
    %v85 = vld [vmem:[#allocation2 + $0x1e0] sm:$0xff]
    %v86 = vld [vmem:[#allocation2 + $0x1e8] sm:$0xff]
    %v87 = vld [vmem:[#allocation2 + $0x1f0] sm:$0xff]
    %v88 = vld [vmem:[#allocation2 + $0x1f8] sm:$0xff]
    %v89 = vld [vmem:[#allocation2 + $0x200] sm:$0xff]
    %v90 = vld [vmem:[#allocation2 + $0x208] sm:$0xff]
    %v91 = vld [vmem:[#allocation2 + $0x210] sm:$0xff]
    %v92 = vld [vmem:[#allocation2 + $0x218] sm:$0xff]
    %v93 = vld [vmem:[#allocation2 + $0x220] sm:$0xff]
    %v94 = vld [vmem:[#allocation2 + $0x228] sm:$0xff]
    %v95 = vld [vmem:[#allocation2 + $0x230] sm:$0xff]
    %v96 = vld [vmem:[#allocation2 + $0x238] sm:$0xff]
    %v97 = vld [vmem:[#allocation2 + $0x240] sm:$0xff]
    %v98 = vld [vmem:[#allocation2 + $0x248] sm:$0xff]
    %v99 = vld [vmem:[#allocation2 + $0x250] sm:$0xff]
    %v100 = vld [vmem:[#allocation2 + $0x258] sm:$0xff]
    %v101 = vld [vmem:[#allocation2 + $0x260] sm:$0xff]
    %v102 = vld [vmem:[#allocation2 + $0x268] sm:$0xff]
    %v103 = vld [vmem:[#allocation2 + $0x270] sm:$0xff]
    %v104 = vld [vmem:[#allocation2 + $0x278] sm:$0xff]
    %v105 = vld [vmem:[#allocation2 + $0x280] sm:$0xff]
    %v106 = vld [vmem:[#allocation2 + $0x288] sm:$0xff]
    %v107 = vld [vmem:[#allocation2 + $0x290] sm:$0xff]
    %v108 = vld [vmem:[#allocation2 + $0x298] sm:$0xff]
    %v109 = vld [vmem:[#allocation2 + $0x2a0] sm:$0xff]
    %v110 = vld [vmem:[#allocation2 + $0x2a8] sm:$0xff]
    %v111 = vld [vmem:[#allocation2 + $0x2b0] sm:$0xff]
    %v112 = vld [vmem:[#allocation2 + $0x2b8] sm:$0xff]
    %v113 = vld [vmem:[#allocation2 + $0x2c0] sm:$0xff]
    %v114 = vld [vmem:[#allocation2 + $0x2c8] sm:$0xff]
    %v115 = vld [vmem:[#allocation2 + $0x2d0] sm:$0xff]
    %v116 = vld [vmem:[#allocation2 + $0x2d8] sm:$0xff]
    %v117 = vld [vmem:[#allocation2 + $0x2e0] sm:$0xff]
    %v118 = vld [vmem:[#allocation2 + $0x2e8] sm:$0xff]
    %v119 = vld [vmem:[#allocation2 + $0x2f0] sm:$0xff]
    %v120 = vld [vmem:[#allocation2 + $0x2f8] sm:$0xff]
    %v121 = vld [vmem:[#allocation2 + $0x300] sm:$0xff]
    %v122 = vld [vmem:[#allocation2 + $0x308] sm:$0xff]
    %v123 = vld [vmem:[#allocation2 + $0x310] sm:$0xff]
    %v124 = vld [vmem:[#allocation2 + $0x318] sm:$0xff]
    %v125 = vld [vmem:[#allocation2 + $0x320] sm:$0xff]
    %v126 = vld [vmem:[#allocation2 + $0x328] sm:$0xff]
    %v127 = vld [vmem:[#allocation2 + $0x330] sm:$0xff]
    %v128 = vld [vmem:[#allocation2 + $0x338] sm:$0xff]
    %v129 = vld [vmem:[#allocation2 + $0x340] sm:$0xff]
    %v130 = vld [vmem:[#allocation2 + $0x348] sm:$0xff]
    %v131 = vld [vmem:[#allocation2 + $0x350] sm:$0xff]
    %v132 = vld [vmem:[#allocation2 + $0x358] sm:$0xff]
    %v133 = vld [vmem:[#allocation2 + $0x360] sm:$0xff]
    %v134 = vld [vmem:[#allocation2 + $0x368] sm:$0xff]
    %v135 = vld [vmem:[#allocation2 + $0x370] sm:$0xff]
    %v136 = vld [vmem:[#allocation2 + $0x378] sm:$0xff]
    %v137 = vld [vmem:[#allocation2 + $0x380] sm:$0xff]
    %v138 = vld [vmem:[#allocation2 + $0x388] sm:$0xff]
    %v139 = vld [vmem:[#allocation2 + $0x390] sm:$0xff]
    %v140 = vld [vmem:[#allocation2 + $0x398] sm:$0xff]
    %v141 = vld [vmem:[#allocation2 + $0x3a0] sm:$0xff]
    %v142 = vld [vmem:[#allocation2 + $0x3a8] sm:$0xff]
    %v143 = vld [vmem:[#allocation2 + $0x3b0] sm:$0xff]
    %v144 = vld [vmem:[#allocation2 + $0x3b8] sm:$0xff]
    %v145 = vld [vmem:[#allocation2 + $0x3c0] sm:$0xff]
    %v146 = vld [vmem:[#allocation2 + $0x3c8] sm:$0xff]
    %v147 = vld [vmem:[#allocation2 + $0x3d0] sm:$0xff]
    %v148 = vld [vmem:[#allocation2 + $0x3d8] sm:$0xff]
    %v149 = vld [vmem:[#allocation2 + $0x3e0] sm:$0xff]
    %v150 = vld [vmem:[#allocation2 + $0x3e8] sm:$0xff]
    %v151 = vld [vmem:[#allocation2 + $0x3f0] sm:$0xff]
    %v152 = vld [vmem:[#allocation2 + $0x3f8] sm:$0xff]
    %v153 = vld [vmem:[%s1] sm:$0xff]
    %v154 = vld [vmem:[%s1 + $0x8] sm:$0xff]
    %v155 = vld [vmem:[%s1 + $0x10] sm:$0xff]
    %v156 = vld [vmem:[%s1 + $0x18] sm:$0xff]
    %v157 = vld [vmem:[%s1 + $0x20] sm:$0xff]
    %v158 = vld [vmem:[%s1 + $0x28] sm:$0xff]
    %v159 = vld [vmem:[%s1 + $0x30] sm:$0xff]
    %v160 = vld [vmem:[%s1 + $0x38] sm:$0xff]
    %v161 = vld [vmem:[%s1 + $0x40] sm:$0xff]
    %v162 = vld [vmem:[%s1 + $0x48] sm:$0xff]
    %v163 = vld [vmem:[%s1 + $0x50] sm:$0xff]
    %v164 = vld [vmem:[%s1 + $0x58] sm:$0xff]
    %v165 = vld [vmem:[%s1 + $0x60] sm:$0xff]
    %v166 = vld [vmem:[%s1 + $0x68] sm:$0xff]
    %v167 = vld [vmem:[%s1 + $0x70] sm:$0xff]
    %v168 = vld [vmem:[%s1 + $0x78] sm:$0xff]
    %v169 = vld [vmem:[%s1 + $0x80] sm:$0xff]
    %v170 = vld [vmem:[%s1 + $0x88] sm:$0xff]
    %v171 = vld [vmem:[%s1 + $0x90] sm:$0xff]
    %v172 = vld [vmem:[%s1 + $0x98] sm:$0xff]
    %v173 = vld [vmem:[%s1 + $0xa0] sm:$0xff]
    %v174 = vld [vmem:[%s1 + $0xa8] sm:$0xff]
    %v175 = vld [vmem:[%s1 + $0xb0] sm:$0xff]
    %v176 = vld [vmem:[%s1 + $0xb8] sm:$0xff]
    %v177 = vld [vmem:[%s1 + $0xc0] sm:$0xff]
    %v178 = vld [vmem:[%s1 + $0xc8] sm:$0xff]
    %v179 = vld [vmem:[%s1 + $0xd0] sm:$0xff]
    %v180 = vld [vmem:[%s1 + $0xd8] sm:$0xff]
    %v181 = vld [vmem:[%s1 + $0xe0] sm:$0xff]
    %v182 = vld [vmem:[%s1 + $0xe8] sm:$0xff]
    %v183 = vld [vmem:[%s1 + $0xf0] sm:$0xff]
    %v184 = vld [vmem:[%s1 + $0xf8] sm:$0xff]
    %185 = vmatprep.subr.mxu0 0.0
    %186 = vmatpush1.msra.mxu0 %v168
    %187 = vmatprep.subr.mxu0 0.0
    %188 = vmatpush1.msra.mxu0 %v167
    %189 = vmatprep.subr.mxu0 0.0
    %190 = vmatpush1.msra.mxu0 %v166
    %191 = vmatprep.subr.mxu0 0.0
    %192 = vmatpush1.msra.mxu0 %v165
    %193 = vmatprep.subr.mxu0 0.0
    %194 = vmatpush1.msra.mxu0 %v164
    %195 = vmatprep.subr.mxu0 0.0
    %196 = vmatpush1.msra.mxu0 %v163
    %197 = vmatprep.subr.mxu0 0.0
    %198 = vmatpush1.msra.mxu0 %v162
    %199 = vmatprep.subr.mxu0 0.0
    %200 = vmatpush1.msra.mxu0 %v161
    %201 = vmatprep.subr.mxu0 0.0
    %202 = vmatpush1.msra.mxu0 %v160
    %203 = vmatprep.subr.mxu0 0.0
    %204 = vmatpush1.msra.mxu0 %v159
    %205 = vmatprep.subr.mxu0 0.0
    %206 = vmatpush1.msra.mxu0 %v158
    %207 = vmatprep.subr.mxu0 0.0
    %208 = vmatpush1.msra.mxu0 %v157
    %209 = vmatprep.subr.mxu0 0.0
    %210 = vmatpush1.msra.mxu0 %v156
    %211 = vmatprep.subr.mxu0 0.0
    %212 = vmatpush1.msra.mxu0 %v155
    %213 = vmatprep.subr.mxu0 0.0
    %214 = vmatpush1.msra.mxu0 %v154
    %215 = vmatprep.subr.mxu0 0.0
    %216 = vmatpush1.msra.mxu0 %v153
    %217 = vmatprep.subr.mxu0 0.0
    %218 = vmatpush2.msra.mxu0 %v184
    %219 = vmatprep.subr.mxu0 0.0
    %220 = vmatpush2.msra.mxu0 %v183
    %221 = vmatprep.subr.mxu0 0.0
    %222 = vmatpush2.msra.mxu0 %v182
    %223 = vmatprep.subr.mxu0 0.0
    %224 = vmatpush2.msra.mxu0 %v181
    %225 = vmatprep.subr.mxu0 0.0
    %226 = vmatpush2.msra.mxu0 %v180
    %227 = vmatprep.subr.mxu0 0.0
    %228 = vmatpush2.msra.mxu0 %v179
    %229 = vmatprep.subr.mxu0 0.0
    %230 = vmatpush2.msra.mxu0 %v178
    %231 = vmatprep.subr.mxu0 0.0
    %232 = vmatpush2.msra.mxu0 %v177
    %233 = vmatprep.subr.mxu0 0.0
    %234 = vmatpush2.msra.mxu0 %v176
    %235 = vmatprep.subr.mxu0 0.0
    %236 = vmatpush2.msra.mxu0 %v175
    %237 = vmatprep.subr.mxu0 0.0
    %238 = vmatpush2.msra.mxu0 %v174
    %239 = vmatprep.subr.mxu0 0.0
    %240 = vmatpush2.msra.mxu0 %v173
    %241 = vmatprep.subr.mxu0 0.0
    %242 = vmatpush2.msra.mxu0 %v172
    %243 = vmatprep.subr.mxu0 0.0
    %244 = vmatpush2.msra.mxu0 %v171
    %245 = vmatprep.subr.mxu0 0.0
    %246 = vmatpush2.msra.mxu0 %v170
    %247 = vmatprep.subr.mxu0 0.0
    %248 = vmatpush2.msra.mxu0 %v169
    %249 = vmatprep.mubr.f32.mxu0 %v26
    %250 = vmatmul.mubr.f32.gmra.mxu0 %v25
    %v251 = vpop.f32.mrf.mxu0
    %v252 = vadd.f32 0.0, %v251
    %v253 = vpop.f32.mrf.mxu0
    %254 = vmatprep.mubr.f32.mxu0 %v28
    %255 = vmatmul.mubr.f32.gmra.mxu0 %v27
    %v256 = vpop.f32.mrf.mxu0
    %v257 = vadd.f32 0.0, %v256
    %v258 = vpop.f32.mrf.mxu0
    %259 = vmatprep.mubr.f32.mxu0 %v30
    %260 = vmatmul.mubr.f32.gmra.mxu0 %v29
    %v261 = vpop.f32.mrf.mxu0
    %v262 = vadd.f32 0.0, %v261
    %v263 = vpop.f32.mrf.mxu0
    %264 = vmatprep.mubr.f32.mxu0 %v32
    %265 = vmatmul.mubr.f32.gmra.mxu0 %v31
    %v266 = vpop.f32.mrf.mxu0
    %v267 = vadd.f32 0.0, %v266
    %v268 = vpop.f32.mrf.mxu0
    %269 = vmatprep.mubr.f32.mxu0 %v34
    %270 = vmatmul.mubr.f32.gmra.mxu0 %v33
    %v271 = vpop.f32.mrf.mxu0
    %v272 = vadd.f32 0.0, %v271
    %v273 = vpop.f32.mrf.mxu0
    %274 = vmatprep.mubr.f32.mxu0 %v36
    %275 = vmatmul.mubr.f32.gmra.mxu0 %v35
    %v276 = vpop.f32.mrf.mxu0
    %v277 = vadd.f32 0.0, %v276
    %v278 = vpop.f32.mrf.mxu0
    %279 = vmatprep.mubr.f32.mxu0 %v38
    %280 = vmatmul.mubr.f32.gmra.mxu0 %v37
    %v281 = vpop.f32.mrf.mxu0
    %v282 = vadd.f32 0.0, %v281
    %v283 = vpop.f32.mrf.mxu0
    %284 = vmatprep.mubr.f32.mxu0 %v40
    %285 = vmatmul.mubr.f32.gmra.mxu0 %v39
    %v286 = vpop.f32.mrf.mxu0
    %v287 = vadd.f32 0.0, %v286
    %v288 = vpop.f32.mrf.mxu0
    %289 = vmatprep.mubr.f32.mxu0 %v42
    %290 = vmatmul.mubr.f32.gmra.mxu0 %v41
    %v291 = vpop.f32.mrf.mxu0
    %v292 = vadd.f32 0.0, %v291
    %v293 = vpop.f32.mrf.mxu0
    %294 = vmatprep.mubr.f32.mxu0 %v44
    %295 = vmatmul.mubr.f32.gmra.mxu0 %v43
    %v296 = vpop.f32.mrf.mxu0
    %v297 = vadd.f32 0.0, %v296
    %v298 = vpop.f32.mrf.mxu0
    %299 = vmatprep.mubr.f32.mxu0 %v46
    %300 = vmatmul.mubr.f32.gmra.mxu0 %v45
    %v301 = vpop.f32.mrf.mxu0
    %v302 = vadd.f32 0.0, %v301
    %v303 = vpop.f32.mrf.mxu0
    %304 = vmatprep.mubr.f32.mxu0 %v48
    %305 = vmatmul.mubr.f32.gmra.mxu0 %v47
    %v306 = vpop.f32.mrf.mxu0
    %v307 = vadd.f32 0.0, %v306
    %v308 = vpop.f32.mrf.mxu0
    %309 = vmatprep.mubr.f32.mxu0 %v50
    %310 = vmatmul.mubr.f32.gmra.mxu0 %v49
    %v311 = vpop.f32.mrf.mxu0
    %v312 = vadd.f32 0.0, %v311
    %v313 = vpop.f32.mrf.mxu0
    %314 = vmatprep.mubr.f32.mxu0 %v52
    %315 = vmatmul.mubr.f32.gmra.mxu0 %v51
    %v316 = vpop.f32.mrf.mxu0
    %v317 = vadd.f32 0.0, %v316
    %v318 = vpop.f32.mrf.mxu0
    %319 = vmatprep.mubr.f32.mxu0 %v54
    %320 = vmatmul.mubr.f32.gmra.mxu0 %v53
    %v321 = vpop.f32.mrf.mxu0
    %v322 = vadd.f32 0.0, %v321
    %v323 = vpop.f32.mrf.mxu0
    %324 = vmatprep.mubr.f32.mxu0 %v56
    %325 = vmatmul.mubr.f32.gmra.mxu0 %v55
    %v326 = vpop.f32.mrf.mxu0
    %v327 = vadd.f32 0.0, %v326
    %v328 = vpop.f32.mrf.mxu0
    %329 = vmatprep.mubr.f32.mxu0 %v58
    %330 = vmatmul.mubr.f32.gmra.mxu0 %v57
    %v331 = vpop.f32.mrf.mxu0
    %v332 = vadd.f32 0.0, %v331
    %v333 = vpop.f32.mrf.mxu0
    %334 = vmatprep.mubr.f32.mxu0 %v60
    %335 = vmatmul.mubr.f32.gmra.mxu0 %v59
    %v336 = vpop.f32.mrf.mxu0
    %v337 = vadd.f32 0.0, %v336
    %v338 = vpop.f32.mrf.mxu0
    %339 = vmatprep.mubr.f32.mxu0 %v62
    %340 = vmatmul.mubr.f32.gmra.mxu0 %v61
    %v341 = vpop.f32.mrf.mxu0
    %v342 = vadd.f32 0.0, %v341
    %v343 = vpop.f32.mrf.mxu0
    %344 = vmatprep.mubr.f32.mxu0 %v64
    %345 = vmatmul.mubr.f32.gmra.mxu0 %v63
    %v346 = vpop.f32.mrf.mxu0
    %v347 = vadd.f32 0.0, %v346
    %v348 = vpop.f32.mrf.mxu0
    %349 = vmatprep.mubr.f32.mxu0 %v66
    %350 = vmatmul.mubr.f32.gmra.mxu0 %v65
    %v351 = vpop.f32.mrf.mxu0
    %v352 = vadd.f32 0.0, %v351
    %v353 = vpop.f32.mrf.mxu0
    %354 = vmatprep.mubr.f32.mxu0 %v68
    %355 = vmatmul.mubr.f32.gmra.mxu0 %v67
    %v356 = vpop.f32.mrf.mxu0
    %v357 = vadd.f32 0.0, %v356
    %v358 = vpop.f32.mrf.mxu0
    %359 = vmatprep.mubr.f32.mxu0 %v70
    %360 = vmatmul.mubr.f32.gmra.mxu0 %v69
    %v361 = vpop.f32.mrf.mxu0
    %v362 = vadd.f32 0.0, %v361
    %v363 = vpop.f32.mrf.mxu0
    %364 = vmatprep.mubr.f32.mxu0 %v72
    %365 = vmatmul.mubr.f32.gmra.mxu0 %v71
    %v366 = vpop.f32.mrf.mxu0
    %v367 = vadd.f32 0.0, %v366
    %v368 = vpop.f32.mrf.mxu0
    %369 = vmatprep.mubr.f32.mxu0 %v74
    %370 = vmatmul.mubr.f32.gmra.mxu0 %v73
    %v371 = vpop.f32.mrf.mxu0
    %v372 = vadd.f32 0.0, %v371
    %v373 = vpop.f32.mrf.mxu0
    %374 = vmatprep.mubr.f32.mxu0 %v76
    %375 = vmatmul.mubr.f32.gmra.mxu0 %v75
    %v376 = vpop.f32.mrf.mxu0
    %v377 = vadd.f32 0.0, %v376
    %v378 = vpop.f32.mrf.mxu0
    %379 = vmatprep.mubr.f32.mxu0 %v78
    %380 = vmatmul.mubr.f32.gmra.mxu0 %v77
    %v381 = vpop.f32.mrf.mxu0
    %v382 = vadd.f32 0.0, %v381
    %v383 = vpop.f32.mrf.mxu0
    %384 = vmatprep.mubr.f32.mxu0 %v80
    %385 = vmatmul.mubr.f32.gmra.mxu0 %v79
    %v386 = vpop.f32.mrf.mxu0
    %v387 = vadd.f32 0.0, %v386
    %v388 = vpop.f32.mrf.mxu0
    %389 = vmatprep.mubr.f32.mxu0 %v82
    %390 = vmatmul.mubr.f32.gmra.mxu0 %v81
    %v391 = vpop.f32.mrf.mxu0
    %v392 = vadd.f32 0.0, %v391
    %v393 = vpop.f32.mrf.mxu0
    %394 = vmatprep.mubr.f32.mxu0 %v84
    %395 = vmatmul.mubr.f32.gmra.mxu0 %v83
    %v396 = vpop.f32.mrf.mxu0
    %v397 = vadd.f32 0.0, %v396
    %v398 = vpop.f32.mrf.mxu0
    %399 = vmatprep.mubr.f32.mxu0 %v86
    %400 = vmatmul.mubr.f32.gmra.mxu0 %v85
    %v401 = vpop.f32.mrf.mxu0
    %v402 = vadd.f32 0.0, %v401
    %v403 = vpop.f32.mrf.mxu0
    %404 = vmatprep.mubr.f32.mxu0 %v88
    %405 = vmatmul.mubr.f32.gmra.mxu0 %v87
    %v406 = vpop.f32.mrf.mxu0
    %v407 = vadd.f32 0.0, %v406
    %v408 = vpop.f32.mrf.mxu0
    %409 = vmatprep.mubr.f32.mxu0 %v90
    %410 = vmatmul.mubr.f32.gmra.mxu0 %v89
    %v411 = vpop.f32.mrf.mxu0
    %v412 = vadd.f32 0.0, %v411
    %v413 = vpop.f32.mrf.mxu0
    %414 = vmatprep.mubr.f32.mxu0 %v92
    %415 = vmatmul.mubr.f32.gmra.mxu0 %v91
    %v416 = vpop.f32.mrf.mxu0
    %v417 = vadd.f32 0.0, %v416
    %v418 = vpop.f32.mrf.mxu0
    %419 = vmatprep.mubr.f32.mxu0 %v94
    %420 = vmatmul.mubr.f32.gmra.mxu0 %v93
    %v421 = vpop.f32.mrf.mxu0
    %v422 = vadd.f32 0.0, %v421
    %v423 = vpop.f32.mrf.mxu0
    %424 = vmatprep.mubr.f32.mxu0 %v96
    %425 = vmatmul.mubr.f32.gmra.mxu0 %v95
    %v426 = vpop.f32.mrf.mxu0
    %v427 = vadd.f32 0.0, %v426
    %v428 = vpop.f32.mrf.mxu0
    %429 = vmatprep.mubr.f32.mxu0 %v98
    %430 = vmatmul.mubr.f32.gmra.mxu0 %v97
    %v431 = vpop.f32.mrf.mxu0
    %v432 = vadd.f32 0.0, %v431
    %v433 = vpop.f32.mrf.mxu0
    %434 = vmatprep.mubr.f32.mxu0 %v100
    %435 = vmatmul.mubr.f32.gmra.mxu0 %v99
    %v436 = vpop.f32.mrf.mxu0
    %v437 = vadd.f32 0.0, %v436
    %v438 = vpop.f32.mrf.mxu0
    %439 = vmatprep.mubr.f32.mxu0 %v102
    %440 = vmatmul.mubr.f32.gmra.mxu0 %v101
    %v441 = vpop.f32.mrf.mxu0
    %v442 = vadd.f32 0.0, %v441
    %v443 = vpop.f32.mrf.mxu0
    %444 = vmatprep.mubr.f32.mxu0 %v104
    %445 = vmatmul.mubr.f32.gmra.mxu0 %v103
    %v446 = vpop.f32.mrf.mxu0
    %v447 = vadd.f32 0.0, %v446
    %v448 = vpop.f32.mrf.mxu0
    %449 = vmatprep.mubr.f32.mxu0 %v106
    %450 = vmatmul.mubr.f32.gmra.mxu0 %v105
    %v451 = vpop.f32.mrf.mxu0
    %v452 = vadd.f32 0.0, %v451
    %v453 = vpop.f32.mrf.mxu0
    %454 = vmatprep.mubr.f32.mxu0 %v108
    %455 = vmatmul.mubr.f32.gmra.mxu0 %v107
    %v456 = vpop.f32.mrf.mxu0
    %v457 = vadd.f32 0.0, %v456
    %v458 = vpop.f32.mrf.mxu0
    %459 = vmatprep.mubr.f32.mxu0 %v110
    %460 = vmatmul.mubr.f32.gmra.mxu0 %v109
    %v461 = vpop.f32.mrf.mxu0
    %v462 = vadd.f32 0.0, %v461
    %v463 = vpop.f32.mrf.mxu0
    %464 = vmatprep.mubr.f32.mxu0 %v112
    %465 = vmatmul.mubr.f32.gmra.mxu0 %v111
    %v466 = vpop.f32.mrf.mxu0
    %v467 = vadd.f32 0.0, %v466
    %v468 = vpop.f32.mrf.mxu0
    %469 = vmatprep.mubr.f32.mxu0 %v114
    %470 = vmatmul.mubr.f32.gmra.mxu0 %v113
    %v471 = vpop.f32.mrf.mxu0
    %v472 = vadd.f32 0.0, %v471
    %v473 = vpop.f32.mrf.mxu0
    %474 = vmatprep.mubr.f32.mxu0 %v116
    %475 = vmatmul.mubr.f32.gmra.mxu0 %v115
    %v476 = vpop.f32.mrf.mxu0
    %v477 = vadd.f32 0.0, %v476
    %v478 = vpop.f32.mrf.mxu0
    %479 = vmatprep.mubr.f32.mxu0 %v118
    %480 = vmatmul.mubr.f32.gmra.mxu0 %v117
    %v481 = vpop.f32.mrf.mxu0
    %v482 = vadd.f32 0.0, %v481
    %v483 = vpop.f32.mrf.mxu0
    %484 = vmatprep.mubr.f32.mxu0 %v120
    %485 = vmatmul.mubr.f32.gmra.mxu0 %v119
    %v486 = vpop.f32.mrf.mxu0
    %v487 = vadd.f32 0.0, %v486
    %v488 = vpop.f32.mrf.mxu0
    %489 = vmatprep.mubr.f32.mxu0 %v122
    %490 = vmatmul.mubr.f32.gmra.mxu0 %v121
    %v491 = vpop.f32.mrf.mxu0
    %v492 = vadd.f32 0.0, %v491
    %v493 = vpop.f32.mrf.mxu0
    %494 = vmatprep.mubr.f32.mxu0 %v124
    %495 = vmatmul.mubr.f32.gmra.mxu0 %v123
    %v496 = vpop.f32.mrf.mxu0
    %v497 = vadd.f32 0.0, %v496
    %v498 = vpop.f32.mrf.mxu0
    %499 = vmatprep.mubr.f32.mxu0 %v126
    %500 = vmatmul.mubr.f32.gmra.mxu0 %v125
    %v501 = vpop.f32.mrf.mxu0
    %v502 = vadd.f32 0.0, %v501
    %v503 = vpop.f32.mrf.mxu0
    %504 = vmatprep.mubr.f32.mxu0 %v128
    %505 = vmatmul.mubr.f32.gmra.mxu0 %v127
    %v506 = vpop.f32.mrf.mxu0
    %v507 = vadd.f32 0.0, %v506
    %v508 = vpop.f32.mrf.mxu0
    %509 = vmatprep.mubr.f32.mxu0 %v130
    %510 = vmatmul.mubr.f32.gmra.mxu0 %v129
    %v511 = vpop.f32.mrf.mxu0
    %v512 = vadd.f32 0.0, %v511
    %v513 = vpop.f32.mrf.mxu0
    %514 = vmatprep.mubr.f32.mxu0 %v132
    %515 = vmatmul.mubr.f32.gmra.mxu0 %v131
    %v516 = vpop.f32.mrf.mxu0
    %v517 = vadd.f32 0.0, %v516
    %v518 = vpop.f32.mrf.mxu0
    %519 = vmatprep.mubr.f32.mxu0 %v134
    %520 = vmatmul.mubr.f32.gmra.mxu0 %v133
    %v521 = vpop.f32.mrf.mxu0
    %v522 = vadd.f32 0.0, %v521
    %v523 = vpop.f32.mrf.mxu0
    %524 = vmatprep.mubr.f32.mxu0 %v136
    %525 = vmatmul.mubr.f32.gmra.mxu0 %v135
    %v526 = vpop.f32.mrf.mxu0
    %v527 = vadd.f32 0.0, %v526
    %v528 = vpop.f32.mrf.mxu0
    %529 = vmatprep.mubr.f32.mxu0 %v138
    %530 = vmatmul.mubr.f32.gmra.mxu0 %v137
    %v531 = vpop.f32.mrf.mxu0
    %v532 = vadd.f32 0.0, %v531
    %v533 = vpop.f32.mrf.mxu0
    %534 = vmatprep.mubr.f32.mxu0 %v140
    %535 = vmatmul.mubr.f32.gmra.mxu0 %v139
    %v536 = vpop.f32.mrf.mxu0
    %v537 = vadd.f32 0.0, %v536
    %v538 = vpop.f32.mrf.mxu0
    %539 = vmatprep.mubr.f32.mxu0 %v142
    %540 = vmatmul.mubr.f32.gmra.mxu0 %v141
    %v541 = vpop.f32.mrf.mxu0
    %v542 = vadd.f32 0.0, %v541
    %v543 = vpop.f32.mrf.mxu0
    %544 = vmatprep.mubr.f32.mxu0 %v144
    %545 = vmatmul.mubr.f32.gmra.mxu0 %v143
    %v546 = vpop.f32.mrf.mxu0
    %v547 = vadd.f32 0.0, %v546
    %v548 = vpop.f32.mrf.mxu0
    %549 = vmatprep.mubr.f32.mxu0 %v146
    %550 = vmatmul.mubr.f32.gmra.mxu0 %v145
    %v551 = vpop.f32.mrf.mxu0
    %v552 = vadd.f32 0.0, %v551
    %v553 = vpop.f32.mrf.mxu0
    %554 = vmatprep.mubr.f32.mxu0 %v148
    %555 = vmatmul.mubr.f32.gmra.mxu0 %v147
    %v556 = vpop.f32.mrf.mxu0
    %v557 = vadd.f32 0.0, %v556
    %v558 = vpop.f32.mrf.mxu0
    %559 = vmatprep.mubr.f32.mxu0 %v150
    %560 = vmatmul.mubr.f32.gmra.mxu0 %v149
    %v561 = vpop.f32.mrf.mxu0
    %v562 = vadd.f32 0.0, %v561
    %v563 = vpop.f32.mrf.mxu0
    %564 = vmatprep.mubr.f32.mxu0 %v152
    %565 = vmatmul.mubr.f32.gmra.mxu0 %v151
    %v566 = vpop.f32.mrf.mxu0
    %v567 = vadd.f32 0.0, %v566
    %v568 = vpop.f32.mrf.mxu0
    %569 = vdwg.mxu0
    %vm570 = vcmask 64512
    %571 = vst.msk [vmem:[%s2] sm:$0xff] %vm570, %v252
    %572 = vst.msk [vmem:[%s2 + $0x8] sm:$0xff] %vm570, %v257
    %573 = vst.msk [vmem:[%s2 + $0x10] sm:$0xff] %vm570, %v262
    %574 = vst.msk [vmem:[%s2 + $0x18] sm:$0xff] %vm570, %v267
    %575 = vst.msk [vmem:[%s2 + $0x20] sm:$0xff] %vm570, %v272
    %576 = vst.msk [vmem:[%s2 + $0x28] sm:$0xff] %vm570, %v277
    %577 = vst.msk [vmem:[%s2 + $0x30] sm:$0xff] %vm570, %v282
    %578 = vst.msk [vmem:[%s2 + $0x38] sm:$0xff] %vm570, %v287
    %579 = vst.msk [vmem:[%s2 + $0x40] sm:$0xff] %vm570, %v292
    %580 = vst.msk [vmem:[%s2 + $0x48] sm:$0xff] %vm570, %v297
    %581 = vst.msk [vmem:[%s2 + $0x50] sm:$0xff] %vm570, %v302
    %582 = vst.msk [vmem:[%s2 + $0x58] sm:$0xff] %vm570, %v307
    %583 = vst.msk [vmem:[%s2 + $0x60] sm:$0xff] %vm570, %v312
    %584 = vst.msk [vmem:[%s2 + $0x68] sm:$0xff] %vm570, %v317
    %585 = vst.msk [vmem:[%s2 + $0x70] sm:$0xff] %vm570, %v322
    %586 = vst.msk [vmem:[%s2 + $0x78] sm:$0xff] %vm570, %v327
    %587 = vst.msk [vmem:[%s2 + $0x80] sm:$0xff] %vm570, %v332
    %588 = vst.msk [vmem:[%s2 + $0x88] sm:$0xff] %vm570, %v337
    %589 = vst.msk [vmem:[%s2 + $0x90] sm:$0xff] %vm570, %v342
    %590 = vst.msk [vmem:[%s2 + $0x98] sm:$0xff] %vm570, %v347
    %591 = vst.msk [vmem:[%s2 + $0xa0] sm:$0xff] %vm570, %v352
    %592 = vst.msk [vmem:[%s2 + $0xa8] sm:$0xff] %vm570, %v357
    %593 = vst.msk [vmem:[%s2 + $0xb0] sm:$0xff] %vm570, %v362
    %594 = vst.msk [vmem:[%s2 + $0xb8] sm:$0xff] %vm570, %v367
    %595 = vst.msk [vmem:[%s2 + $0xc0] sm:$0xff] %vm570, %v372
    %596 = vst.msk [vmem:[%s2 + $0xc8] sm:$0xff] %vm570, %v377
    %597 = vst.msk [vmem:[%s2 + $0xd0] sm:$0xff] %vm570, %v382
    %598 = vst.msk [vmem:[%s2 + $0xd8] sm:$0xff] %vm570, %v387
    %599 = vst.msk [vmem:[%s2 + $0xe0] sm:$0xff] %vm570, %v392
    %600 = vst.msk [vmem:[%s2 + $0xe8] sm:$0xff] %vm570, %v397
    %601 = vst.msk [vmem:[%s2 + $0xf0] sm:$0xff] %vm570, %v402
    %602 = vst.msk [vmem:[%s2 + $0xf8] sm:$0xff] %vm570, %v407
    %603 = vst.msk [vmem:[%s2 + $0x100] sm:$0xff] %vm570, %v412
    %604 = vst.msk [vmem:[%s2 + $0x108] sm:$0xff] %vm570, %v417
    %605 = vst.msk [vmem:[%s2 + $0x110] sm:$0xff] %vm570, %v422
    %606 = vst.msk [vmem:[%s2 + $0x118] sm:$0xff] %vm570, %v427
    %607 = vst.msk [vmem:[%s2 + $0x120] sm:$0xff] %vm570, %v432
    %608 = vst.msk [vmem:[%s2 + $0x128] sm:$0xff] %vm570, %v437
    %609 = vst.msk [vmem:[%s2 + $0x130] sm:$0xff] %vm570, %v442
    %610 = vst.msk [vmem:[%s2 + $0x138] sm:$0xff] %vm570, %v447
    %611 = vst.msk [vmem:[%s2 + $0x140] sm:$0xff] %vm570, %v452
    %612 = vst.msk [vmem:[%s2 + $0x148] sm:$0xff] %vm570, %v457
    %613 = vst.msk [vmem:[%s2 + $0x150] sm:$0xff] %vm570, %v462
    %614 = vst.msk [vmem:[%s2 + $0x158] sm:$0xff] %vm570, %v467
    %615 = vst.msk [vmem:[%s2 + $0x160] sm:$0xff] %vm570, %v472
    %616 = vst.msk [vmem:[%s2 + $0x168] sm:$0xff] %vm570, %v477
    %617 = vst.msk [vmem:[%s2 + $0x170] sm:$0xff] %vm570, %v482
    %618 = vst.msk [vmem:[%s2 + $0x178] sm:$0xff] %vm570, %v487
    %619 = vst.msk [vmem:[%s2 + $0x180] sm:$0xff] %vm570, %v492
    %620 = vst.msk [vmem:[%s2 + $0x188] sm:$0xff] %vm570, %v497
    %621 = vst.msk [vmem:[%s2 + $0x190] sm:$0xff] %vm570, %v502
    %622 = vst.msk [vmem:[%s2 + $0x198] sm:$0xff] %vm570, %v507
    %623 = vst.msk [vmem:[%s2 + $0x1a0] sm:$0xff] %vm570, %v512
    %624 = vst.msk [vmem:[%s2 + $0x1a8] sm:$0xff] %vm570, %v517
    %625 = vst.msk [vmem:[%s2 + $0x1b0] sm:$0xff] %vm570, %v522
    %626 = vst.msk [vmem:[%s2 + $0x1b8] sm:$0xff] %vm570, %v527
    %627 = vst.msk [vmem:[%s2 + $0x1c0] sm:$0xff] %vm570, %v532
    %628 = vst.msk [vmem:[%s2 + $0x1c8] sm:$0xff] %vm570, %v537
    %629 = vst.msk [vmem:[%s2 + $0x1d0] sm:$0xff] %vm570, %v542
    %630 = vst.msk [vmem:[%s2 + $0x1d8] sm:$0xff] %vm570, %v547
    %631 = vst.msk [vmem:[%s2 + $0x1e0] sm:$0xff] %vm570, %v552
    %632 = vst.msk [vmem:[%s2 + $0x1e8] sm:$0xff] %vm570, %v557
    %633 = vst.msk [vmem:[%s2 + $0x1f0] sm:$0xff] %vm570, %v562
    %634 = vst.msk [vmem:[%s2 + $0x1f8] sm:$0xff] %vm570, %v567
    // Predicated region
    $region14: #{ipex_lm_head_forward.1} parent=1 // pred_check
      _
    $region15: #{ipex_lm_head_forward.1} parent=1 // pred_check_branch
      %636 = sbr.rel (0) target = $region17
    $region16: #{ipex_lm_head_forward.1} parent=1 // pred_region
      _
    $region17: #{ipex_lm_head_forward.1} parent=1 // pred_fallthru
      _
    // Predicated region
    $region18: #{ipex_lm_head_forward.1} parent=1 // pred_check
      _
    $region19: #{ipex_lm_head_forward.1} parent=1 // pred_check_branch
      %638 = sbr.rel (0) target = $region21
    $region20: #{ipex_lm_head_forward.1} parent=1 // pred_region
      _
    $region21: #{ipex_lm_head_forward.1} parent=1 // pred_fallthru
      _
    %639 = vsyncpa [#allocation3], 1

</llo_original>
